<compile_context>
chip_gen: v7x
topology: tpu7x:2x2x1
jax: 0.10.0
libtpu: 0.0.40
codegen_flags: <defaults>
</compile_context>

<pallas_src>
import numpy as np
import jax
import jax.numpy as jnp
from jax.experimental import pallas as pl
from jax.experimental.pallas import tpu as pltpu

LANES = 128
SUBLANES = 8
K_OFFSETS = 27  # 3x3x3 kernel volume


def _round_up(x, m):
    return ((x + m - 1) // m) * m


# ----------------------------- Pallas kernel ------------------------------- #
def _fused_conv_kernel(g_ref, w_ref, o_ref):
    # One MXU matmul per Np tile: [tile_m, Kc] (bf16) @ [Kc, C_out_pad] (bf16) -> f32
    o_ref[...] = jnp.dot(g_ref[...], w_ref[...], preferred_element_type=jnp.float32)


def sparse_conv3x3x3(gathered, w_flat, *, tile_m):
    """gathered: [Np_pad, Kc] bf16, w_flat: [Kc, C_out_pad] bf16 -> [Np_pad, C_out_pad] f32."""
    Np_pad, Kc = gathered.shape
    C_out_pad = w_flat.shape[1]
    assert Np_pad % tile_m == 0 and tile_m % SUBLANES == 0
    assert Kc % LANES == 0 and C_out_pad % LANES == 0

    return pl.pallas_call(
        _fused_conv_kernel,
        out_shape=jax.ShapeDtypeStruct((Np_pad, C_out_pad), jnp.float32),
        grid_spec=pltpu.PrefetchScalarGridSpec(
            num_scalar_prefetch=0,
            grid=(Np_pad // tile_m,),
            in_specs=[
                pl.BlockSpec((tile_m, Kc), lambda i: (i, 0)),       # streamed Np tiles
                pl.BlockSpec((Kc, C_out_pad), lambda i: (0, 0)),    # weights resident in VMEM
            ],
            out_specs=pl.BlockSpec((tile_m, C_out_pad), lambda i: (i, 0)),
        ),
        compiler_params=pltpu.CompilerParams(
            dimension_semantics=("parallel",),   # independent Np tiles -> shard across TCs
        ),
    )(gathered, w_flat)


# ------------------------------ host-side glue ------------------------------ #
def build_neighbor_maps(coords_voxel):
    """For each of the 27 offsets in {-1,0,1}^3, neighbor voxel index or -1 (ME kernel map).

    Vectorized: coordinates are encoded to unique int64 keys, sorted once, and each offset
    is resolved with a searchsorted lookup (no per-point Python loops).
    """
    coords = np.asarray(coords_voxel, dtype=np.int64)          # [Nv, 4] = (batch, x, y, z)
    N = coords.shape[0]
    mins = coords.min(axis=0) - 1
    span = coords.max(axis=0) - mins + 3                       # margin for +/-1 offsets

    def encode(c):
        k = c[:, 0] - mins[0]
        for d in range(1, 4):
            k = k * span[d] + (c[:, d] - mins[d])
        return k

    keys = encode(coords)
    order = np.argsort(keys)
    keys_sorted = keys[order]

    offsets = [(dx, dy, dz) for dx in (-1, 0, 1) for dy in (-1, 0, 1) for dz in (-1, 0, 1)]
    nbr = np.full((len(offsets), N), -1, dtype=np.int32)
    for k, (dx, dy, dz) in enumerate(offsets):
        q = coords.copy()
        q[:, 1] += dx
        q[:, 2] += dy
        q[:, 3] += dz
        qk = encode(q)
        pos = np.clip(np.searchsorted(keys_sorted, qk), 0, N - 1)
        hit = keys_sorted[pos] == qk
        nbr[k] = np.where(hit, order[pos].astype(np.int32), -1)
    return nbr


def sem_head_forward(feats_voxel, coords_voxel, inverse_map, field_batch, weights,
                     num_batches, *, tile_m=256):
    """logits = conv(x); logits = logits.slice(in_field); return decomposed_features."""
    Nv, C_in = feats_voxel.shape
    K, _, n_cls = weights.shape                                  # K = 27
    assert K == K_OFFSETS

    # Padded sizes (lane / sublane friendly).
    Kc_raw = K * C_in
    Kc_pad = _round_up(Kc_raw, LANES)                            # 864 -> 896 for C_in=32
    C_out_pad = _round_up(n_cls, LANES)
    tile_m = max(SUBLANES, min(_round_up(tile_m, SUBLANES), _round_up(Nv, LANES)))
    Np_pad = _round_up(max(Nv, 1), tile_m)

    # Kernel map: zero-row trick (absent neighbor / padded rows -> row Nv == zeros).
    nbr = build_neighbor_maps(np.asarray(coords_voxel))          # [27, Nv], -1 = absent
    nbr_full = np.full((K, Np_pad), Nv, dtype=np.int32)
    nbr_full[:, :Nv] = np.where(nbr >= 0, nbr, Nv)

    feats_ext = jnp.zeros((Nv + 1, C_in), jnp.bfloat16).at[:Nv].set(
        feats_voxel.astype(jnp.bfloat16))

    # ME kernel-map application (per-offset neighbor gather), laid out as [Np_pad, K*C_in].
    # TODO(synk): fold this gather into the kernel (scalar-prefetched indices + in-kernel row
    # gather / manual DMA) to avoid materializing the [Np, K*C_in] slab in HBM at very large Np.
    idx = jnp.asarray(nbr_full.T)                                # [Np_pad, 27]
    gathered = feats_ext[idx].reshape(Np_pad, Kc_raw)            # [Np_pad, 27*C_in] bf16
    gathered = jnp.pad(gathered, ((0, 0), (0, Kc_pad - Kc_raw)))

    # Weights -> [Kc_pad, C_out_pad] bf16 (padded contraction rows / output lanes are zero).
    w_flat = jnp.zeros((Kc_pad, C_out_pad), jnp.bfloat16)
    w_flat = w_flat.at[:Kc_raw, :n_cls].set(
        weights.astype(jnp.bfloat16).reshape(Kc_raw, n_cls))

    logits_voxel = sparse_conv3x3x3(gathered, w_flat, tile_m=tile_m)[:Nv, :n_cls]

    # .slice(in_field): map voxel logits back to the original field points
    logits_field = logits_voxel[jnp.asarray(inverse_map)]

    # .decomposed_features: per-batch list of feature tensors
    fb = np.asarray(field_batch)
    decomposed = [logits_field[np.where(fb == b)[0]] for b in range(num_batches)]
    return decomposed, logits_voxel, gathered, w_flat


# ----------------------------------- main ----------------------------------- #
if __name__ == "__main__":
    key = jax.random.PRNGKey(0)
    B = 2                   # batch size
    n_field_per_batch = 64  # points per batch in the TensorField
    C_in = 32               # int(cfg.BACKBONE.CHANNELS[-1] * cfg.BACKBONE.CR)
    n_cls = 16              # NUM_CLASSES
    extent = 8              # voxel grid extent

    k1, k2, k3 = jax.random.split(key, 3)

    # Field (original point) coordinates: (batch, x, y, z)
    xyz = np.asarray(jax.random.randint(k1, (B * n_field_per_batch, 3), 0, extent))
    batch_col = np.repeat(np.arange(B), n_field_per_batch)[:, None]
    coords_field = np.concatenate([batch_col, xyz], axis=1).astype(np.int32)   # [128, 4]

    # Quantize field -> sparse tensor voxels (what happened upstream to make `x`)
    coords_voxel, inverse_map = np.unique(coords_field, axis=0, return_inverse=True)
    Nv = coords_voxel.shape[0]

    # Voxel features coming from the backbone sparse tensor x
    feats_voxel = jax.random.normal(k2, (Nv, C_in), dtype=jnp.float32)

    # MinkowskiConvolution weights: [kernel_volume=27, C_in, n_cls] (bias=False default)
    W = (jax.random.normal(k3, (K_OFFSETS, C_in, n_cls), dtype=jnp.float32)
         / np.sqrt(27.0 * C_in)).astype(jnp.float32)

    decomposed, logits_voxel, gathered, w_flat = sem_head_forward(
        feats_voxel, coords_voxel, inverse_map, coords_field[:, 0], W, B, tile_m=256)

    jax.block_until_ready(logits_voxel)
    for d in decomposed:
        jax.block_until_ready(d)

    # Pure numpy reference of the fused sparse-conv matmul (same bf16-rounded operands)
    g_f32 = np.asarray(gathered.astype(jnp.float32))
    w_f32 = np.asarray(w_flat.astype(jnp.float32))
    ref_voxel = (g_f32 @ w_f32)[:Nv, :n_cls]

    np.testing.assert_allclose(np.asarray(logits_voxel), ref_voxel, rtol=1e-2, atol=1e-2)
    assert sum(d.shape[0] for d in decomposed) == coords_field.shape[0]
    assert all(d.shape[1] == n_cls for d in decomposed)

    print("KERNEL_OK")
</pallas_src>

<mosaic_0001>
module attributes {stable_mosaic.version = 11 : i64} {
  func.func @_fused_conv_kernel(%arg0: i32, %arg1: memref<128x896xbf16, #tpu.memory_space<vmem>>, %arg2: memref<896x128xbf16, #tpu.memory_space<vmem>>, %arg3: memref<128x128xf32, #tpu.memory_space<vmem>>) attributes {dimension_semantics = [#tpu.dimension_semantics<parallel>], iteration_bounds = array<i64: 1>, scalar_prefetch = 0 : i64, scratch_operands = 0 : i64, tpu.core_type = #tpu.core_type<tc>, window_params = [{transform_indices = @transform_0, window_bounds = array<i64: 128, 896>}, {pipeline_mode = #tpu.pipeline_mode<synchronous>, transform_indices = @transform_1, window_bounds = array<i64: 896, 128>}, {transform_indices = @transform_2, window_bounds = array<i64: 128, 128>}]} {
    %c0 = arith.constant 0 : index
    %c0_0 = arith.constant 0 : index
    %0 = vector.load %arg1[%c0, %c0_0] : memref<128x896xbf16, #tpu.memory_space<vmem>>, vector<128x896xbf16>
    %c0_1 = arith.constant 0 : index
    %c0_2 = arith.constant 0 : index
    %1 = vector.load %arg2[%c0_1, %c0_2] : memref<896x128xbf16, #tpu.memory_space<vmem>>, vector<896x128xbf16>
    %cst = arith.constant dense<0.000000e+00> : vector<128x128xf32>
    %2 = tpu.matmul %0, %1, %cst {dimension_numbers = #tpu.dot_dimension_numbers<[1], [0], [0], [1], [0, 0, 1, 1], [], []>} : vector<128x896xbf16>, vector<896x128xbf16>, vector<128x128xf32> -> vector<128x128xf32>
    %c0_3 = arith.constant 0 : index
    %c0_4 = arith.constant 0 : index
    %3 = vector.load %arg3[%c0_3, %c0_4] : memref<128x128xf32, #tpu.memory_space<vmem>>, vector<128x128xf32>
    tpu.vector_store %arg3[%c0_3, %c0_4], %2 {strides = array<i32>} : memref<128x128xf32, #tpu.memory_space<vmem>>, vector<128x128xf32>,
    return
  }
  func.func @transform_0(%arg0: i32) -> (i32, i32) {
    %c0_i32 = arith.constant 0 : i32
    %c0_i32_0 = arith.constant 0 : i32
    return %arg0, %c0_i32 : i32, i32
  }
  func.func @transform_1(%arg0: i32) -> (i32, i32) {
    %c0_i32 = arith.constant 0 : i32
    %c0_i32_0 = arith.constant 0 : i32
    %c0_i32_1 = arith.constant 0 : i32
    return %c0_i32, %c0_i32_0 : i32, i32
  }
  func.func @transform_2(%arg0: i32) -> (i32, i32) {
    %c0_i32 = arith.constant 0 : i32
    %c0_i32_0 = arith.constant 0 : i32
    return %arg0, %c0_i32 : i32, i32
  }
}

</mosaic_0001>

<llo_original>
// kernel: tpu_custom_call.1
$region0: #{tpu_custom_call.1}
  #allocation0 [shape = 'u32[]', space=smem, size = 0x4, offset = 0x4, fixed_abs, tag = 'smem constant byte address 0x4 - core index']
  #allocation1 [shape = 'u32[144,128]{1,0:T(1,128)}', space=vmem, size = 0x12000, scoped, tag = 'internal scratch']
  %s0 = inlined_call_operand.hbm [shape: bf16[128,896], index: 0, kind: input, shape index: {}]
  %s1 = inlined_call_operand.hbm [shape: bf16[896,128], index: 1, kind: input, shape index: {}]
  %s2 = inlined_call_operand.hbm [shape: f32[128,128], index: 2, kind: output, shape index: {}]
  %s3 = sld [smem:[#allocation0]]
  $region26: #{tpu_custom_call.1} parent=0
    _
  %s5 = ssub.s32 1, %s3
  %s6 = scalar_select 0, %s5, %s3
  $region1: #{tpu_custom_call.1} parent=0
    #allocation2 [shape = 'u8[229376]{0}', space=vmem, size = 0x38000, scoped, tag = 'input window, operand 0, single buffered']
    #allocation3 [shape = 's32[1]{0}', space=sflag, size = 0x4, scoped, tag = 'scoped memory for tpu_custom_call.1']
    #allocation4 [shape = 's32[1]{0}', space=sflag, size = 0x4, scoped, tag = 'scoped memory for tpu_custom_call.1']
    #allocation5 [shape = 'u8[229376]{0}', space=vmem, size = 0x38000, scoped, tag = 'input window, operand 1, single buffered']
    #allocation6 [shape = 's32[1]{0}', space=sflag, size = 0x4, scoped, tag = 'scoped memory for tpu_custom_call.1']
    #allocation7 [shape = 'u8[65536]{0}', space=vmem, size = 0x10000, scoped, tag = 'output window, operand 0, single buffered']
    %7 = vsyncpa [#allocation3], 0
    %8 = vsyncpa [#allocation6], 0
    %9 = vsyncpa [#allocation4], 0
    // Predicated region
    $region2: #{tpu_custom_call.1} parent=1 // pred_check
      _
    $region3: #{tpu_custom_call.1} parent=1 // pred_check_branch
      %11 = sbr.rel (0) target = $region5
    $region4: #{tpu_custom_call.1} parent=1 // pred_region
      %s13 = ssub.s32 7168, 7168
      %14 = vsyncadd [#allocation3], %s13
      %s15 = sshll.u32 [#allocation2], 4
      %s16 = int_to_ptr.vmem [resolvable:$true] %s15
      %21 = dma.hbm_to_vmem [thread:$0]  %s0, 7168, %s16, [#allocation3], 448, 448, 28
    $region5: #{tpu_custom_call.1} parent=1 // pred_fallthru
      _
    // Predicated region
    $region6: #{tpu_custom_call.1} parent=1 // pred_check
      _
    $region7: #{tpu_custom_call.1} parent=1 // pred_check_branch
      %23 = sbr.rel (0) target = $region9
    $region8: #{tpu_custom_call.1} parent=1 // pred_region
      %s25 = ssub.s32 7168, 7168
      %26 = vsyncadd [#allocation6], %s25
      %s27 = sshll.u32 [#allocation5], 4
      %s28 = int_to_ptr.vmem [resolvable:$true] %s27
      %33 = dma.hbm_to_vmem [thread:$0]  %s1, 7168, %s28, [#allocation6], 64, 64, 4
    $region9: #{tpu_custom_call.1} parent=1 // pred_fallthru
      _
    // Predicated region
    $region10: #{tpu_custom_call.1} parent=1 // pred_check
      _
    $region11: #{tpu_custom_call.1} parent=1 // pred_check_branch
      %35 = sbr.rel (0) target = $region13
    $region12: #{tpu_custom_call.1} parent=1 // pred_region
      %36 = dma.done [#allocation3], 7168
    $region13: #{tpu_custom_call.1} parent=1 // pred_fallthru
      _
    // Predicated region
    $region14: #{tpu_custom_call.1} parent=1 // pred_check
      _
    $region15: #{tpu_custom_call.1} parent=1 // pred_check_branch
      %38 = sbr.rel (0) target = $region17
    $region16: #{tpu_custom_call.1} parent=1 // pred_region
      %39 = dma.done [#allocation6], 7168
    $region17: #{tpu_custom_call.1} parent=1 // pred_fallthru
      _
    %v41 = vld [vmem:[#allocation2] sm:$0xff]
    %v42 = vld [vmem:[#allocation2 + $0x8] sm:$0xff]
    %v43 = vld [vmem:[#allocation2 + $0x10] sm:$0xff]
    %v44 = vld [vmem:[#allocation2 + $0x18] sm:$0xf]
    %v45 = vld [vmem:[#allocation2 + $0x1c] sm:$0xff]
    %v46 = vld [vmem:[#allocation2 + $0x24] sm:$0xff]
    %v47 = vld [vmem:[#allocation2 + $0x2c] sm:$0xff]
    %v48 = vld [vmem:[#allocation2 + $0x34] sm:$0xf]
    %v49 = vld [vmem:[#allocation2 + $0x38] sm:$0xff]
    %v50 = vld [vmem:[#allocation2 + $0x40] sm:$0xff]
    %v51 = vld [vmem:[#allocation2 + $0x48] sm:$0xff]
    %v52 = vld [vmem:[#allocation2 + $0x50] sm:$0xf]
    %v53 = vld [vmem:[#allocation2 + $0x54] sm:$0xff]
    %v54 = vld [vmem:[#allocation2 + $0x5c] sm:$0xff]
    %v55 = vld [vmem:[#allocation2 + $0x64] sm:$0xff]
    %v56 = vld [vmem:[#allocation2 + $0x6c] sm:$0xf]
    %v57 = vld [vmem:[#allocation2 + $0x70] sm:$0xff]
    %v58 = vld [vmem:[#allocation2 + $0x78] sm:$0xff]
    %v59 = vld [vmem:[#allocation2 + $0x80] sm:$0xff]
    %v60 = vld [vmem:[#allocation2 + $0x88] sm:$0xf]
    %v61 = vld [vmem:[#allocation2 + $0x8c] sm:$0xff]
    %v62 = vld [vmem:[#allocation2 + $0x94] sm:$0xff]
    %v63 = vld [vmem:[#allocation2 + $0x9c] sm:$0xff]
    %v64 = vld [vmem:[#allocation2 + $0xa4] sm:$0xf]
    %v65 = vld [vmem:[#allocation2 + $0xa8] sm:$0xff]
    %v66 = vld [vmem:[#allocation2 + $0xb0] sm:$0xff]
    %v67 = vld [vmem:[#allocation2 + $0xb8] sm:$0xff]
    %v68 = vld [vmem:[#allocation2 + $0xc0] sm:$0xf]
    %v69 = vld [vmem:[#allocation2 + $0xc4] sm:$0xff]
    %v70 = vld [vmem:[#allocation2 + $0xcc] sm:$0xff]
    %v71 = vld [vmem:[#allocation2 + $0xd4] sm:$0xff]
    %v72 = vld [vmem:[#allocation2 + $0xdc] sm:$0xf]
    %v73 = vld [vmem:[#allocation2 + $0xe0] sm:$0xff]
    %v74 = vld [vmem:[#allocation2 + $0xe8] sm:$0xff]
    %v75 = vld [vmem:[#allocation2 + $0xf0] sm:$0xff]
    %v76 = vld [vmem:[#allocation2 + $0xf8] sm:$0xf]
    %v77 = vld [vmem:[#allocation2 + $0xfc] sm:$0xff]
    %v78 = vld [vmem:[#allocation2 + $0x104] sm:$0xff]
    %v79 = vld [vmem:[#allocation2 + $0x10c] sm:$0xff]
    %v80 = vld [vmem:[#allocation2 + $0x114] sm:$0xf]
    %v81 = vld [vmem:[#allocation2 + $0x118] sm:$0xff]
    %v82 = vld [vmem:[#allocation2 + $0x120] sm:$0xff]
    %v83 = vld [vmem:[#allocation2 + $0x128] sm:$0xff]
    %v84 = vld [vmem:[#allocation2 + $0x130] sm:$0xf]
    %v85 = vld [vmem:[#allocation2 + $0x134] sm:$0xff]
    %v86 = vld [vmem:[#allocation2 + $0x13c] sm:$0xff]
    %v87 = vld [vmem:[#allocation2 + $0x144] sm:$0xff]
    %v88 = vld [vmem:[#allocation2 + $0x14c] sm:$0xf]
    %v89 = vld [vmem:[#allocation2 + $0x150] sm:$0xff]
    %v90 = vld [vmem:[#allocation2 + $0x158] sm:$0xff]
    %v91 = vld [vmem:[#allocation2 + $0x160] sm:$0xff]
    %v92 = vld [vmem:[#allocation2 + $0x168] sm:$0xf]
    %v93 = vld [vmem:[#allocation2 + $0x16c] sm:$0xff]
    %v94 = vld [vmem:[#allocation2 + $0x174] sm:$0xff]
    %v95 = vld [vmem:[#allocation2 + $0x17c] sm:$0xff]
    %v96 = vld [vmem:[#allocation2 + $0x184] sm:$0xf]
    %v97 = vld [vmem:[#allocation2 + $0x188] sm:$0xff]
    %v98 = vld [vmem:[#allocation2 + $0x190] sm:$0xff]
    %v99 = vld [vmem:[#allocation2 + $0x198] sm:$0xff]
    %v100 = vld [vmem:[#allocation2 + $0x1a0] sm:$0xf]
    %v101 = vld [vmem:[#allocation2 + $0x1a4] sm:$0xff]
    %v102 = vld [vmem:[#allocation2 + $0x1ac] sm:$0xff]
    %v103 = vld [vmem:[#allocation2 + $0x1b4] sm:$0xff]
    %v104 = vld [vmem:[#allocation2 + $0x1bc] sm:$0xf]
    %v105 = vld [vmem:[#allocation5] sm:$0xf]
    %v106 = vld [vmem:[#allocation5 + $0x4] sm:$0xf]
    %v107 = vld [vmem:[#allocation5 + $0x8] sm:$0xf]
    %v108 = vld [vmem:[#allocation5 + $0xc] sm:$0xf]
    %v109 = vld [vmem:[#allocation5 + $0x10] sm:$0xf]
    %v110 = vld [vmem:[#allocation5 + $0x14] sm:$0xf]
    %v111 = vld [vmem:[#allocation5 + $0x18] sm:$0xf]
    %v112 = vld [vmem:[#allocation5 + $0x1c] sm:$0xf]
    %v113 = vld [vmem:[#allocation5 + $0x20] sm:$0xf]
    %v114 = vld [vmem:[#allocation5 + $0x24] sm:$0xf]
    %v115 = vld [vmem:[#allocation5 + $0x28] sm:$0xf]
    %v116 = vld [vmem:[#allocation5 + $0x2c] sm:$0xf]
    %v117 = vld [vmem:[#allocation5 + $0x30] sm:$0xf]
    %v118 = vld [vmem:[#allocation5 + $0x34] sm:$0xf]
    %v119 = vld [vmem:[#allocation5 + $0x38] sm:$0xf]
    %v120 = vld [vmem:[#allocation5 + $0x3c] sm:$0xf]
    %v121 = vld [vmem:[#allocation5 + $0x40] sm:$0xf]
    %v122 = vld [vmem:[#allocation5 + $0x44] sm:$0xf]
    %v123 = vld [vmem:[#allocation5 + $0x48] sm:$0xf]
    %v124 = vld [vmem:[#allocation5 + $0x4c] sm:$0xf]
    %v125 = vld [vmem:[#allocation5 + $0x50] sm:$0xf]
    %v126 = vld [vmem:[#allocation5 + $0x54] sm:$0xf]
    %v127 = vld [vmem:[#allocation5 + $0x58] sm:$0xf]
    %v128 = vld [vmem:[#allocation5 + $0x5c] sm:$0xf]
    %v129 = vld [vmem:[#allocation5 + $0x60] sm:$0xf]
    %v130 = vld [vmem:[#allocation5 + $0x64] sm:$0xf]
    %v131 = vld [vmem:[#allocation5 + $0x68] sm:$0xf]
    %v132 = vld [vmem:[#allocation5 + $0x6c] sm:$0xf]
    %v133 = vld [vmem:[#allocation5 + $0x70] sm:$0xf]
    %v134 = vld [vmem:[#allocation5 + $0x74] sm:$0xf]
    %v135 = vld [vmem:[#allocation5 + $0x78] sm:$0xf]
    %v136 = vld [vmem:[#allocation5 + $0x7c] sm:$0xf]
    %v137 = vld [vmem:[#allocation5 + $0x80] sm:$0xf]
    %v138 = vld [vmem:[#allocation5 + $0x84] sm:$0xf]
    %v139 = vld [vmem:[#allocation5 + $0x88] sm:$0xf]
    %v140 = vld [vmem:[#allocation5 + $0x8c] sm:$0xf]
    %v141 = vld [vmem:[#allocation5 + $0x90] sm:$0xf]
    %v142 = vld [vmem:[#allocation5 + $0x94] sm:$0xf]
    %v143 = vld [vmem:[#allocation5 + $0x98] sm:$0xf]
    %v144 = vld [vmem:[#allocation5 + $0x9c] sm:$0xf]
    %v145 = vld [vmem:[#allocation5 + $0xa0] sm:$0xf]
    %v146 = vld [vmem:[#allocation5 + $0xa4] sm:$0xf]
    %v147 = vld [vmem:[#allocation5 + $0xa8] sm:$0xf]
    %v148 = vld [vmem:[#allocation5 + $0xac] sm:$0xf]
    %v149 = vld [vmem:[#allocation5 + $0xb0] sm:$0xf]
    %v150 = vld [vmem:[#allocation5 + $0xb4] sm:$0xf]
    %v151 = vld [vmem:[#allocation5 + $0xb8] sm:$0xf]
    %v152 = vld [vmem:[#allocation5 + $0xbc] sm:$0xf]
    %v153 = vld [vmem:[#allocation5 + $0xc0] sm:$0xf]
    %v154 = vld [vmem:[#allocation5 + $0xc4] sm:$0xf]
    %v155 = vld [vmem:[#allocation5 + $0xc8] sm:$0xf]
    %v156 = vld [vmem:[#allocation5 + $0xcc] sm:$0xf]
    %v157 = vld [vmem:[#allocation5 + $0xd0] sm:$0xf]
    %v158 = vld [vmem:[#allocation5 + $0xd4] sm:$0xf]
    %v159 = vld [vmem:[#allocation5 + $0xd8] sm:$0xf]
    %v160 = vld [vmem:[#allocation5 + $0xdc] sm:$0xf]
    %v161 = vld [vmem:[#allocation5 + $0xe0] sm:$0xf]
    %v162 = vld [vmem:[#allocation5 + $0xe4] sm:$0xf]
    %v163 = vld [vmem:[#allocation5 + $0xe8] sm:$0xf]
    %v164 = vld [vmem:[#allocation5 + $0xec] sm:$0xf]
    %v165 = vld [vmem:[#allocation5 + $0xf0] sm:$0xf]
    %v166 = vld [vmem:[#allocation5 + $0xf4] sm:$0xf]
    %v167 = vld [vmem:[#allocation5 + $0xf8] sm:$0xf]
    %v168 = vld [vmem:[#allocation5 + $0xfc] sm:$0xf]
    %v169 = vld [vmem:[#allocation5 + $0x100] sm:$0xf]
    %v170 = vld [vmem:[#allocation5 + $0x104] sm:$0xf]
    %v171 = vld [vmem:[#allocation5 + $0x108] sm:$0xf]
    %v172 = vld [vmem:[#allocation5 + $0x10c] sm:$0xf]
    %v173 = vld [vmem:[#allocation5 + $0x110] sm:$0xf]
    %v174 = vld [vmem:[#allocation5 + $0x114] sm:$0xf]
    %v175 = vld [vmem:[#allocation5 + $0x118] sm:$0xf]
    %v176 = vld [vmem:[#allocation5 + $0x11c] sm:$0xf]
    %v177 = vld [vmem:[#allocation5 + $0x120] sm:$0xf]
    %v178 = vld [vmem:[#allocation5 + $0x124] sm:$0xf]
    %v179 = vld [vmem:[#allocation5 + $0x128] sm:$0xf]
    %v180 = vld [vmem:[#allocation5 + $0x12c] sm:$0xf]
    %v181 = vld [vmem:[#allocation5 + $0x130] sm:$0xf]
    %v182 = vld [vmem:[#allocation5 + $0x134] sm:$0xf]
    %v183 = vld [vmem:[#allocation5 + $0x138] sm:$0xf]
    %v184 = vld [vmem:[#allocation5 + $0x13c] sm:$0xf]
    %v185 = vld [vmem:[#allocation5 + $0x140] sm:$0xf]
    %v186 = vld [vmem:[#allocation5 + $0x144] sm:$0xf]
    %v187 = vld [vmem:[#allocation5 + $0x148] sm:$0xf]
    %v188 = vld [vmem:[#allocation5 + $0x14c] sm:$0xf]
    %v189 = vld [vmem:[#allocation5 + $0x150] sm:$0xf]
    %v190 = vld [vmem:[#allocation5 + $0x154] sm:$0xf]
    %v191 = vld [vmem:[#allocation5 + $0x158] sm:$0xf]
    %v192 = vld [vmem:[#allocation5 + $0x15c] sm:$0xf]
    %v193 = vld [vmem:[#allocation5 + $0x160] sm:$0xf]
    %v194 = vld [vmem:[#allocation5 + $0x164] sm:$0xf]
    %v195 = vld [vmem:[#allocation5 + $0x168] sm:$0xf]
    %v196 = vld [vmem:[#allocation5 + $0x16c] sm:$0xf]
    %v197 = vld [vmem:[#allocation5 + $0x170] sm:$0xf]
    %v198 = vld [vmem:[#allocation5 + $0x174] sm:$0xf]
    %v199 = vld [vmem:[#allocation5 + $0x178] sm:$0xf]
    %v200 = vld [vmem:[#allocation5 + $0x17c] sm:$0xf]
    %v201 = vld [vmem:[#allocation5 + $0x180] sm:$0xf]
    %v202 = vld [vmem:[#allocation5 + $0x184] sm:$0xf]
    %v203 = vld [vmem:[#allocation5 + $0x188] sm:$0xf]
    %v204 = vld [vmem:[#allocation5 + $0x18c] sm:$0xf]
    %v205 = vld [vmem:[#allocation5 + $0x190] sm:$0xf]
    %v206 = vld [vmem:[#allocation5 + $0x194] sm:$0xf]
    %v207 = vld [vmem:[#allocation5 + $0x198] sm:$0xf]
    %v208 = vld [vmem:[#allocation5 + $0x19c] sm:$0xf]
    %v209 = vld [vmem:[#allocation5 + $0x1a0] sm:$0xf]
    %v210 = vld [vmem:[#allocation5 + $0x1a4] sm:$0xf]
    %v211 = vld [vmem:[#allocation5 + $0x1a8] sm:$0xf]
    %v212 = vld [vmem:[#allocation5 + $0x1ac] sm:$0xf]
    %v213 = vld [vmem:[#allocation5 + $0x1b0] sm:$0xf]
    %v214 = vld [vmem:[#allocation5 + $0x1b4] sm:$0xf]
    %v215 = vld [vmem:[#allocation5 + $0x1b8] sm:$0xf]
    %v216 = vld [vmem:[#allocation5 + $0x1bc] sm:$0xf]
    %v281 = vunpack.c.l.b16 %v41
    %v282 = vunpack.c.h.b16 %v41
    %v283 = vunpack.c.l.b16 %v42
    %v284 = vunpack.c.h.b16 %v42
    %v285 = vunpack.c.l.b16 %v43
    %v286 = vunpack.c.h.b16 %v43
    %v287 = vunpack.c.l.b16 %v44
    %v288 = vunpack.c.l.b16 %v45
    %v289 = vunpack.c.h.b16 %v45
    %v290 = vunpack.c.l.b16 %v46
    %v291 = vunpack.c.h.b16 %v46
    %v292 = vunpack.c.l.b16 %v47
    %v293 = vunpack.c.h.b16 %v47
    %v294 = vunpack.c.l.b16 %v48
    %v295 = vunpack.c.l.b16 %v49
    %v296 = vunpack.c.h.b16 %v49
    %v297 = vunpack.c.l.b16 %v50
    %v298 = vunpack.c.h.b16 %v50
    %v299 = vunpack.c.l.b16 %v51
    %v300 = vunpack.c.h.b16 %v51
    %v301 = vunpack.c.l.b16 %v52
    %v302 = vunpack.c.l.b16 %v53
    %v303 = vunpack.c.h.b16 %v53
    %v304 = vunpack.c.l.b16 %v54
    %v305 = vunpack.c.h.b16 %v54
    %v306 = vunpack.c.l.b16 %v55
    %v307 = vunpack.c.h.b16 %v55
    %v308 = vunpack.c.l.b16 %v56
    %v309 = vunpack.c.l.b16 %v57
    %v310 = vunpack.c.h.b16 %v57
    %v311 = vunpack.c.l.b16 %v58
    %v312 = vunpack.c.h.b16 %v58
    %v313 = vunpack.c.l.b16 %v59
    %v314 = vunpack.c.h.b16 %v59
    %v315 = vunpack.c.l.b16 %v60
    %v316 = vunpack.c.l.b16 %v61
    %v317 = vunpack.c.h.b16 %v61
    %v318 = vunpack.c.l.b16 %v62
    %v319 = vunpack.c.h.b16 %v62
    %v320 = vunpack.c.l.b16 %v63
    %v321 = vunpack.c.h.b16 %v63
    %v322 = vunpack.c.l.b16 %v64
    %v323 = vunpack.c.l.b16 %v65
    %v324 = vunpack.c.h.b16 %v65
    %v325 = vunpack.c.l.b16 %v66
    %v326 = vunpack.c.h.b16 %v66
    %v327 = vunpack.c.l.b16 %v67
    %v328 = vunpack.c.h.b16 %v67
    %v329 = vunpack.c.l.b16 %v68
    %v330 = vunpack.c.l.b16 %v69
    %v331 = vunpack.c.h.b16 %v69
    %v332 = vunpack.c.l.b16 %v70
    %v333 = vunpack.c.h.b16 %v70
    %v334 = vunpack.c.l.b16 %v71
    %v335 = vunpack.c.h.b16 %v71
    %v336 = vunpack.c.l.b16 %v72
    %v337 = vunpack.c.l.b16 %v73
    %v338 = vunpack.c.h.b16 %v73
    %v339 = vunpack.c.l.b16 %v74
    %v340 = vunpack.c.h.b16 %v74
    %v341 = vunpack.c.l.b16 %v75
    %v342 = vunpack.c.h.b16 %v75
    %v343 = vunpack.c.l.b16 %v76
    %v344 = vunpack.c.l.b16 %v77
    %v345 = vunpack.c.h.b16 %v77
    %v346 = vunpack.c.l.b16 %v78
    %v347 = vunpack.c.h.b16 %v78
    %v348 = vunpack.c.l.b16 %v79
    %v349 = vunpack.c.h.b16 %v79
    %v350 = vunpack.c.l.b16 %v80
    %v351 = vunpack.c.l.b16 %v81
    %v352 = vunpack.c.h.b16 %v81
    %v353 = vunpack.c.l.b16 %v82
    %v354 = vunpack.c.h.b16 %v82
    %v355 = vunpack.c.l.b16 %v83
    %v356 = vunpack.c.h.b16 %v83
    %v357 = vunpack.c.l.b16 %v84
    %v358 = vunpack.c.l.b16 %v85
    %v359 = vunpack.c.h.b16 %v85
    %v360 = vunpack.c.l.b16 %v86
    %v361 = vunpack.c.h.b16 %v86
    %v362 = vunpack.c.l.b16 %v87
    %v363 = vunpack.c.h.b16 %v87
    %v364 = vunpack.c.l.b16 %v88
    %v365 = vunpack.c.l.b16 %v89
    %v366 = vunpack.c.h.b16 %v89
    %v367 = vunpack.c.l.b16 %v90
    %v368 = vunpack.c.h.b16 %v90
    %v369 = vunpack.c.l.b16 %v91
    %v370 = vunpack.c.h.b16 %v91
    %v371 = vunpack.c.l.b16 %v92
    %v372 = vunpack.c.l.b16 %v93
    %v373 = vunpack.c.h.b16 %v93
    %v374 = vunpack.c.l.b16 %v94
    %v375 = vunpack.c.h.b16 %v94
    %v376 = vunpack.c.l.b16 %v95
    %v377 = vunpack.c.h.b16 %v95
    %v378 = vunpack.c.l.b16 %v96
    %v379 = vunpack.c.l.b16 %v97
    %v380 = vunpack.c.h.b16 %v97
    %v381 = vunpack.c.l.b16 %v98
    %v382 = vunpack.c.h.b16 %v98
    %v383 = vunpack.c.l.b16 %v99
    %v384 = vunpack.c.h.b16 %v99
    %v385 = vunpack.c.l.b16 %v100
    %v386 = vunpack.c.l.b16 %v101
    %v387 = vunpack.c.h.b16 %v101
    %v388 = vunpack.c.l.b16 %v102
    %v389 = vunpack.c.h.b16 %v102
    %v390 = vunpack.c.l.b16 %v103
    %v391 = vunpack.c.h.b16 %v103
    %v392 = vunpack.c.l.b16 %v104
    %v393 = vpack.c.b16 %v288, %v281
    %v394 = vpack.c.b16 %v289, %v282
    %v395 = vpack.c.b16 %v290, %v283
    %v396 = vpack.c.b16 %v291, %v284
    %v397 = vpack.c.b16 %v292, %v285
    %v398 = vpack.c.b16 %v293, %v286
    %v399 = vpack.c.b16 %v294, %v287
    %v400 = vpack.c.b16 %v302, %v295
    %v401 = vpack.c.b16 %v303, %v296
    %v402 = vpack.c.b16 %v304, %v297
    %v403 = vpack.c.b16 %v305, %v298
    %v404 = vpack.c.b16 %v306, %v299
    %v405 = vpack.c.b16 %v307, %v300
    %v406 = vpack.c.b16 %v308, %v301
    %v407 = vpack.c.b16 %v316, %v309
    %v408 = vpack.c.b16 %v317, %v310
    %v409 = vpack.c.b16 %v318, %v311
    %v410 = vpack.c.b16 %v319, %v312
    %v411 = vpack.c.b16 %v320, %v313
    %v412 = vpack.c.b16 %v321, %v314
    %v413 = vpack.c.b16 %v322, %v315
    %v414 = vpack.c.b16 %v330, %v323
    %v415 = vpack.c.b16 %v331, %v324
    %v416 = vpack.c.b16 %v332, %v325
    %v417 = vpack.c.b16 %v333, %v326
    %v418 = vpack.c.b16 %v334, %v327
    %v419 = vpack.c.b16 %v335, %v328
    %v420 = vpack.c.b16 %v336, %v329
    %v421 = vpack.c.b16 %v344, %v337
    %v422 = vpack.c.b16 %v345, %v338
    %v423 = vpack.c.b16 %v346, %v339
    %v424 = vpack.c.b16 %v347, %v340
    %v425 = vpack.c.b16 %v348, %v341
    %v426 = vpack.c.b16 %v349, %v342
    %v427 = vpack.c.b16 %v350, %v343
    %v428 = vpack.c.b16 %v358, %v351
    %v429 = vpack.c.b16 %v359, %v352
    %v430 = vpack.c.b16 %v360, %v353
    %v431 = vpack.c.b16 %v361, %v354
    %v432 = vpack.c.b16 %v362, %v355
    %v433 = vpack.c.b16 %v363, %v356
    %v434 = vpack.c.b16 %v364, %v357
    %v435 = vpack.c.b16 %v372, %v365
    %v436 = vpack.c.b16 %v373, %v366
    %v437 = vpack.c.b16 %v374, %v367
    %v438 = vpack.c.b16 %v375, %v368
    %v439 = vpack.c.b16 %v376, %v369
    %v440 = vpack.c.b16 %v377, %v370
    %v441 = vpack.c.b16 %v378, %v371
    %v442 = vpack.c.b16 %v386, %v379
    %v443 = vpack.c.b16 %v387, %v380
    %v444 = vpack.c.b16 %v388, %v381
    %v445 = vpack.c.b16 %v389, %v382
    %v446 = vpack.c.b16 %v390, %v383
    %v447 = vpack.c.b16 %v391, %v384
    %v448 = vpack.c.b16 %v392, %v385
    %v617 = vunpack.c.l.b16 %v105
    %v618 = vunpack.c.l.b16 %v106
    %v619 = vunpack.c.l.b16 %v107
    %v620 = vunpack.c.l.b16 %v108
    %v621 = vunpack.c.l.b16 %v109
    %v622 = vunpack.c.l.b16 %v110
    %v623 = vunpack.c.l.b16 %v111
    %v624 = vunpack.c.l.b16 %v112
    %v625 = vunpack.c.l.b16 %v113
    %v626 = vunpack.c.l.b16 %v114
    %v627 = vunpack.c.l.b16 %v115
    %v628 = vunpack.c.l.b16 %v116
    %v629 = vunpack.c.l.b16 %v117
    %v630 = vunpack.c.l.b16 %v118
    %v631 = vunpack.c.l.b16 %v119
    %v632 = vunpack.c.l.b16 %v120
    %v633 = vunpack.c.l.b16 %v121
    %v634 = vunpack.c.l.b16 %v122
    %v635 = vunpack.c.l.b16 %v123
    %v636 = vunpack.c.l.b16 %v124
    %v637 = vunpack.c.l.b16 %v125
    %v638 = vunpack.c.l.b16 %v126
    %v639 = vunpack.c.l.b16 %v127
    %v640 = vunpack.c.l.b16 %v128
    %v641 = vunpack.c.l.b16 %v129
    %v642 = vunpack.c.l.b16 %v130
    %v643 = vunpack.c.l.b16 %v131
    %v644 = vunpack.c.l.b16 %v132
    %v645 = vunpack.c.l.b16 %v133
    %v646 = vunpack.c.l.b16 %v134
    %v647 = vunpack.c.l.b16 %v135
    %v648 = vunpack.c.l.b16 %v136
    %v649 = vunpack.c.l.b16 %v137
    %v650 = vunpack.c.l.b16 %v138
    %v651 = vunpack.c.l.b16 %v139
    %v652 = vunpack.c.l.b16 %v140
    %v653 = vunpack.c.l.b16 %v141
    %v654 = vunpack.c.l.b16 %v142
    %v655 = vunpack.c.l.b16 %v143
    %v656 = vunpack.c.l.b16 %v144
    %v657 = vunpack.c.l.b16 %v145
    %v658 = vunpack.c.l.b16 %v146
    %v659 = vunpack.c.l.b16 %v147
    %v660 = vunpack.c.l.b16 %v148
    %v661 = vunpack.c.l.b16 %v149
    %v662 = vunpack.c.l.b16 %v150
    %v663 = vunpack.c.l.b16 %v151
    %v664 = vunpack.c.l.b16 %v152
    %v665 = vunpack.c.l.b16 %v153
    %v666 = vunpack.c.l.b16 %v154
    %v667 = vunpack.c.l.b16 %v155
    %v668 = vunpack.c.l.b16 %v156
    %v669 = vunpack.c.l.b16 %v157
    %v670 = vunpack.c.l.b16 %v158
    %v671 = vunpack.c.l.b16 %v159
    %v672 = vunpack.c.l.b16 %v160
    %v673 = vunpack.c.l.b16 %v161
    %v674 = vunpack.c.l.b16 %v162
    %v675 = vunpack.c.l.b16 %v163
    %v676 = vunpack.c.l.b16 %v164
    %v677 = vunpack.c.l.b16 %v165
    %v678 = vunpack.c.l.b16 %v166
    %v679 = vunpack.c.l.b16 %v167
    %v680 = vunpack.c.l.b16 %v168
    %v681 = vunpack.c.l.b16 %v169
    %v682 = vunpack.c.l.b16 %v170
    %v683 = vunpack.c.l.b16 %v171
    %v684 = vunpack.c.l.b16 %v172
    %v685 = vunpack.c.l.b16 %v173
    %v686 = vunpack.c.l.b16 %v174
    %v687 = vunpack.c.l.b16 %v175
    %v688 = vunpack.c.l.b16 %v176
    %v689 = vunpack.c.l.b16 %v177
    %v690 = vunpack.c.l.b16 %v178
    %v691 = vunpack.c.l.b16 %v179
    %v692 = vunpack.c.l.b16 %v180
    %v693 = vunpack.c.l.b16 %v181
    %v694 = vunpack.c.l.b16 %v182
    %v695 = vunpack.c.l.b16 %v183
    %v696 = vunpack.c.l.b16 %v184
    %v697 = vunpack.c.l.b16 %v185
    %v698 = vunpack.c.l.b16 %v186
    %v699 = vunpack.c.l.b16 %v187
    %v700 = vunpack.c.l.b16 %v188
    %v701 = vunpack.c.l.b16 %v189
    %v702 = vunpack.c.l.b16 %v190
    %v703 = vunpack.c.l.b16 %v191
    %v704 = vunpack.c.l.b16 %v192
    %v705 = vunpack.c.l.b16 %v193
    %v706 = vunpack.c.l.b16 %v194
    %v707 = vunpack.c.l.b16 %v195
    %v708 = vunpack.c.l.b16 %v196
    %v709 = vunpack.c.l.b16 %v197
    %v710 = vunpack.c.l.b16 %v198
    %v711 = vunpack.c.l.b16 %v199
    %v712 = vunpack.c.l.b16 %v200
    %v713 = vunpack.c.l.b16 %v201
    %v714 = vunpack.c.l.b16 %v202
    %v715 = vunpack.c.l.b16 %v203
    %v716 = vunpack.c.l.b16 %v204
    %v717 = vunpack.c.l.b16 %v205
    %v718 = vunpack.c.l.b16 %v206
    %v719 = vunpack.c.l.b16 %v207
    %v720 = vunpack.c.l.b16 %v208
    %v721 = vunpack.c.l.b16 %v209
    %v722 = vunpack.c.l.b16 %v210
    %v723 = vunpack.c.l.b16 %v211
    %v724 = vunpack.c.l.b16 %v212
    %v725 = vunpack.c.l.b16 %v213
    %v726 = vunpack.c.l.b16 %v214
    %v727 = vunpack.c.l.b16 %v215
    %v728 = vunpack.c.l.b16 %v216
    %v729 = vpack.c.b16 %v618, %v617
    %v730 = vpack.c.b16 %v620, %v619
    %v731 = vpack.c.b16 %v622, %v621
    %v732 = vpack.c.b16 %v624, %v623
    %v733 = vpack.c.b16 %v626, %v625
    %v734 = vpack.c.b16 %v628, %v627
    %v735 = vpack.c.b16 %v630, %v629
    %v736 = vpack.c.b16 %v632, %v631
    %v737 = vpack.c.b16 %v634, %v633
    %v738 = vpack.c.b16 %v636, %v635
    %v739 = vpack.c.b16 %v638, %v637
    %v740 = vpack.c.b16 %v640, %v639
    %v741 = vpack.c.b16 %v642, %v641
    %v742 = vpack.c.b16 %v644, %v643
    %v743 = vpack.c.b16 %v646, %v645
    %v744 = vpack.c.b16 %v648, %v647
    %v745 = vpack.c.b16 %v650, %v649
    %v746 = vpack.c.b16 %v652, %v651
    %v747 = vpack.c.b16 %v654, %v653
    %v748 = vpack.c.b16 %v656, %v655
    %v749 = vpack.c.b16 %v658, %v657
    %v750 = vpack.c.b16 %v660, %v659
    %v751 = vpack.c.b16 %v662, %v661
    %v752 = vpack.c.b16 %v664, %v663
    %v753 = vpack.c.b16 %v666, %v665
    %v754 = vpack.c.b16 %v668, %v667
    %v755 = vpack.c.b16 %v670, %v669
    %v756 = vpack.c.b16 %v672, %v671
    %v757 = vpack.c.b16 %v674, %v673
    %v758 = vpack.c.b16 %v676, %v675
    %v759 = vpack.c.b16 %v678, %v677
    %v760 = vpack.c.b16 %v680, %v679
    %v761 = vpack.c.b16 %v682, %v681
    %v762 = vpack.c.b16 %v684, %v683
    %v763 = vpack.c.b16 %v686, %v685
    %v764 = vpack.c.b16 %v688, %v687
    %v765 = vpack.c.b16 %v690, %v689
    %v766 = vpack.c.b16 %v692, %v691
    %v767 = vpack.c.b16 %v694, %v693
    %v768 = vpack.c.b16 %v696, %v695
    %v769 = vpack.c.b16 %v698, %v697
    %v770 = vpack.c.b16 %v700, %v699
    %v771 = vpack.c.b16 %v702, %v701
    %v772 = vpack.c.b16 %v704, %v703
    %v773 = vpack.c.b16 %v706, %v705
    %v774 = vpack.c.b16 %v708, %v707
    %v775 = vpack.c.b16 %v710, %v709
    %v776 = vpack.c.b16 %v712, %v711
    %v777 = vpack.c.b16 %v714, %v713
    %v778 = vpack.c.b16 %v716, %v715
    %v779 = vpack.c.b16 %v718, %v717
    %v780 = vpack.c.b16 %v720, %v719
    %v781 = vpack.c.b16 %v722, %v721
    %v782 = vpack.c.b16 %v724, %v723
    %v783 = vpack.c.b16 %v726, %v725
    %v784 = vpack.c.b16 %v728, %v727
    %841 = vmatprep.subr.bf16.mxu0 0
    %842 = vmatpush1.bf16.msra.mxu0 %v729
    %843 = vmatprep.subr.bf16.mxu0 0
    %844 = vmatpush1.bf16.msra.mxu0 %v730
    %845 = vmatprep.subr.bf16.mxu0 0
    %846 = vmatpush1.bf16.msra.mxu0 %v731
    %847 = vmatprep.subr.bf16.mxu0 0
    %848 = vmatpush1.bf16.msra.mxu0 %v732
    %849 = vmatprep.subr.bf16.mxu0 0
    %850 = vmatpush1.bf16.msra.mxu0 %v733
    %851 = vmatprep.subr.bf16.mxu0 0
    %852 = vmatpush1.bf16.msra.mxu0 %v734
    %853 = vmatprep.subr.bf16.mxu0 0
    %854 = vmatpush1.bf16.msra.mxu0 %v735
    %855 = vmatprep.subr.bf16.mxu0 0
    %856 = vmatpush1.bf16.msra.mxu0 %v736
    %857 = vmatprep.subr.bf16.mxu0 0
    %858 = vmatpush1.bf16.msra.mxu0 %v737
    %859 = vmatprep.subr.bf16.mxu0 0
    %860 = vmatpush1.bf16.msra.mxu0 %v738
    %861 = vmatprep.subr.bf16.mxu0 0
    %862 = vmatpush1.bf16.msra.mxu0 %v739
    %863 = vmatprep.subr.bf16.mxu0 0
    %864 = vmatpush1.bf16.msra.mxu0 %v740
    %865 = vmatprep.subr.bf16.mxu0 0
    %866 = vmatpush1.bf16.msra.mxu0 %v741
    %867 = vmatprep.subr.bf16.mxu0 0
    %868 = vmatpush1.bf16.msra.mxu0 %v742
    %869 = vmatprep.subr.bf16.mxu0 0
    %870 = vmatpush1.bf16.msra.mxu0 %v743
    %871 = vmatprep.subr.bf16.mxu0 0
    %872 = vmatpush1.bf16.msra.mxu0 %v744
    %873 = vmatprep.mubr.bf16.mxu0 %v394
    %874 = vmatmul.mubr.bf16.gmra.mrb[0].mxu0 %v393
    %v875 = vpop.f32.mrb[0].mxu0
    %v876 = vadd.f32 0.0, %v875
    %v877 = vpop.f32.mrb[0].mxu0
    %v878 = vpop.f32.mrb[0].mxu0
    %v879 = vadd.f32 0.0, %v878
    %v880 = vpop.f32.mrb[0].mxu0
    %881 = vmatprep.mubr.bf16.mxu0 %v401
    %882 = vmatmul.mubr.bf16.gmra.mrb[0].mxu0 %v400
    %v883 = vpop.f32.mrb[0].mxu0
    %v884 = vadd.f32 0.0, %v883
    %v885 = vpop.f32.mrb[0].mxu0
    %v886 = vpop.f32.mrb[0].mxu0
    %v887 = vadd.f32 0.0, %v886
    %v888 = vpop.f32.mrb[0].mxu0
    %889 = vmatprep.mubr.bf16.mxu0 %v408
    %890 = vmatmul.mubr.bf16.gmra.mrb[0].mxu0 %v407
    %v891 = vpop.f32.mrb[0].mxu0
    %v892 = vadd.f32 0.0, %v891
    %v893 = vpop.f32.mrb[0].mxu0
    %v894 = vpop.f32.mrb[0].mxu0
    %v895 = vadd.f32 0.0, %v894
    %v896 = vpop.f32.mrb[0].mxu0
    %897 = vmatprep.mubr.bf16.mxu0 %v415
    %898 = vmatmul.mubr.bf16.gmra.mrb[0].mxu0 %v414
    %v899 = vpop.f32.mrb[0].mxu0
    %v900 = vadd.f32 0.0, %v899
    %v901 = vpop.f32.mrb[0].mxu0
    %v902 = vpop.f32.mrb[0].mxu0
    %v903 = vadd.f32 0.0, %v902
    %v904 = vpop.f32.mrb[0].mxu0
    %905 = vmatprep.mubr.bf16.mxu0 %v422
    %906 = vmatmul.mubr.bf16.gmra.mrb[0].mxu0 %v421
    %v907 = vpop.f32.mrb[0].mxu0
    %v908 = vadd.f32 0.0, %v907
    %v909 = vpop.f32.mrb[0].mxu0
    %v910 = vpop.f32.mrb[0].mxu0
    %v911 = vadd.f32 0.0, %v910
    %v912 = vpop.f32.mrb[0].mxu0
    %913 = vmatprep.mubr.bf16.mxu0 %v429
    %914 = vmatmul.mubr.bf16.gmra.mrb[0].mxu0 %v428
    %v915 = vpop.f32.mrb[0].mxu0
    %v916 = vadd.f32 0.0, %v915
    %v917 = vpop.f32.mrb[0].mxu0
    %v918 = vpop.f32.mrb[0].mxu0
    %v919 = vadd.f32 0.0, %v918
    %v920 = vpop.f32.mrb[0].mxu0
    %921 = vmatprep.mubr.bf16.mxu0 %v436
    %922 = vmatmul.mubr.bf16.gmra.mrb[0].mxu0 %v435
    %v923 = vpop.f32.mrb[0].mxu0
    %v924 = vadd.f32 0.0, %v923
    %v925 = vpop.f32.mrb[0].mxu0
    %v926 = vpop.f32.mrb[0].mxu0
    %v927 = vadd.f32 0.0, %v926
    %v928 = vpop.f32.mrb[0].mxu0
    %929 = vmatprep.mubr.bf16.mxu0 %v443
    %930 = vmatmul.mubr.bf16.gmra.mrb[0].mxu0 %v442
    %v931 = vpop.f32.mrb[0].mxu0
    %v932 = vadd.f32 0.0, %v931
    %v933 = vpop.f32.mrb[0].mxu0
    %v934 = vpop.f32.mrb[0].mxu0
    %v935 = vadd.f32 0.0, %v934
    %v936 = vpop.f32.mrb[0].mxu0
    %937 = vdwg.mxu0
    %938 = vmatprep.subr.bf16.mxu0 0
    %939 = vmatpush1.bf16.msra.mxu0 %v745
    %940 = vmatprep.subr.bf16.mxu0 0
    %941 = vmatpush1.bf16.msra.mxu0 %v746
    %942 = vmatprep.subr.bf16.mxu0 0
    %943 = vmatpush1.bf16.msra.mxu0 %v747
    %944 = vmatprep.subr.bf16.mxu0 0
    %945 = vmatpush1.bf16.msra.mxu0 %v748
    %946 = vmatprep.subr.bf16.mxu0 0
    %947 = vmatpush1.bf16.msra.mxu0 %v749
    %948 = vmatprep.subr.bf16.mxu0 0
    %949 = vmatpush1.bf16.msra.mxu0 %v750
    %950 = vmatprep.subr.bf16.mxu0 0
    %951 = vmatpush1.bf16.msra.mxu0 %v751
    %952 = vmatprep.subr.bf16.mxu0 0
    %953 = vmatpush1.bf16.msra.mxu0 %v752
    %954 = vmatprep.subr.bf16.mxu0 0
    %955 = vmatpush1.bf16.msra.mxu0 %v753
    %956 = vmatprep.subr.bf16.mxu0 0
    %957 = vmatpush1.bf16.msra.mxu0 %v754
    %958 = vmatprep.subr.bf16.mxu0 0
    %959 = vmatpush1.bf16.msra.mxu0 %v755
    %960 = vmatprep.subr.bf16.mxu0 0
    %961 = vmatpush1.bf16.msra.mxu0 %v756
    %962 = vmatprep.subr.bf16.mxu0 0
    %963 = vmatpush1.bf16.msra.mxu0 %v757
    %964 = vmatprep.subr.bf16.mxu0 0
    %965 = vmatpush1.bf16.msra.mxu0 %v758
    %966 = vmatprep.subr.bf16.mxu0 0
    %967 = vmatpush1.bf16.msra.mxu0 %v759
    %968 = vmatprep.subr.bf16.mxu0 0
    %969 = vmatpush1.bf16.msra.mxu0 %v760
    %970 = vmatprep.mubr.bf16.mxu0 %v396
    %971 = vmatmul.mubr.bf16.gmra.mrb[0].mxu0 %v395
    %v972 = vpop.f32.mrb[0].mxu0
    %v973 = vadd.f32 %v876, %v972
    %v974 = vpop.f32.mrb[0].mxu0
    %v975 = vpop.f32.mrb[0].mxu0
    %v976 = vadd.f32 %v879, %v975
    %v977 = vpop.f32.mrb[0].mxu0
    %978 = vmatprep.mubr.bf16.mxu0 %v403
    %979 = vmatmul.mubr.bf16.gmra.mrb[0].mxu0 %v402
    %v980 = vpop.f32.mrb[0].mxu0
    %v981 = vadd.f32 %v884, %v980
    %v982 = vpop.f32.mrb[0].mxu0
    %v983 = vpop.f32.mrb[0].mxu0
    %v984 = vadd.f32 %v887, %v983
    %v985 = vpop.f32.mrb[0].mxu0
    %986 = vmatprep.mubr.bf16.mxu0 %v410
    %987 = vmatmul.mubr.bf16.gmra.mrb[0].mxu0 %v409
    %v988 = vpop.f32.mrb[0].mxu0
    %v989 = vadd.f32 %v892, %v988
    %v990 = vpop.f32.mrb[0].mxu0
    %v991 = vpop.f32.mrb[0].mxu0
    %v992 = vadd.f32 %v895, %v991
    %v993 = vpop.f32.mrb[0].mxu0
    %994 = vmatprep.mubr.bf16.mxu0 %v417
    %995 = vmatmul.mubr.bf16.gmra.mrb[0].mxu0 %v416
    %v996 = vpop.f32.mrb[0].mxu0
    %v997 = vadd.f32 %v900, %v996
    %v998 = vpop.f32.mrb[0].mxu0
    %v999 = vpop.f32.mrb[0].mxu0
    %v1000 = vadd.f32 %v903, %v999
    %v1001 = vpop.f32.mrb[0].mxu0
    %1002 = vmatprep.mubr.bf16.mxu0 %v424
    %1003 = vmatmul.mubr.bf16.gmra.mrb[0].mxu0 %v423
    %v1004 = vpop.f32.mrb[0].mxu0
    %v1005 = vadd.f32 %v908, %v1004
    %v1006 = vpop.f32.mrb[0].mxu0
    %v1007 = vpop.f32.mrb[0].mxu0
    %v1008 = vadd.f32 %v911, %v1007
    %v1009 = vpop.f32.mrb[0].mxu0
    %1010 = vmatprep.mubr.bf16.mxu0 %v431
    %1011 = vmatmul.mubr.bf16.gmra.mrb[0].mxu0 %v430
    %v1012 = vpop.f32.mrb[0].mxu0
    %v1013 = vadd.f32 %v916, %v1012
    %v1014 = vpop.f32.mrb[0].mxu0
    %v1015 = vpop.f32.mrb[0].mxu0
    %v1016 = vadd.f32 %v919, %v1015
    %v1017 = vpop.f32.mrb[0].mxu0
    %1018 = vmatprep.mubr.bf16.mxu0 %v438
    %1019 = vmatmul.mubr.bf16.gmra.mrb[0].mxu0 %v437
    %v1020 = vpop.f32.mrb[0].mxu0
    %v1021 = vadd.f32 %v924, %v1020
    %v1022 = vpop.f32.mrb[0].mxu0
    %v1023 = vpop.f32.mrb[0].mxu0
    %v1024 = vadd.f32 %v927, %v1023
    %v1025 = vpop.f32.mrb[0].mxu0
    %1026 = vmatprep.mubr.bf16.mxu0 %v445
    %1027 = vmatmul.mubr.bf16.gmra.mrb[0].mxu0 %v444
    %v1028 = vpop.f32.mrb[0].mxu0
    %v1029 = vadd.f32 %v932, %v1028
    %v1030 = vpop.f32.mrb[0].mxu0
    %v1031 = vpop.f32.mrb[0].mxu0
    %v1032 = vadd.f32 %v935, %v1031
    %v1033 = vpop.f32.mrb[0].mxu0
    %1034 = vdwg.mxu0
    %1035 = vmatprep.subr.bf16.mxu0 0
    %1036 = vmatpush1.bf16.msra.mxu0 %v761
    %1037 = vmatprep.subr.bf16.mxu0 0
    %1038 = vmatpush1.bf16.msra.mxu0 %v762
    %1039 = vmatprep.subr.bf16.mxu0 0
    %1040 = vmatpush1.bf16.msra.mxu0 %v763
    %1041 = vmatprep.subr.bf16.mxu0 0
    %1042 = vmatpush1.bf16.msra.mxu0 %v764
    %1043 = vmatprep.subr.bf16.mxu0 0
    %1044 = vmatpush1.bf16.msra.mxu0 %v765
    %1045 = vmatprep.subr.bf16.mxu0 0
    %1046 = vmatpush1.bf16.msra.mxu0 %v766
    %1047 = vmatprep.subr.bf16.mxu0 0
    %1048 = vmatpush1.bf16.msra.mxu0 %v767
    %1049 = vmatprep.subr.bf16.mxu0 0
    %1050 = vmatpush1.bf16.msra.mxu0 %v768
    %1051 = vmatprep.subr.bf16.mxu0 0
    %1052 = vmatpush1.bf16.msra.mxu0 %v769
    %1053 = vmatprep.subr.bf16.mxu0 0
    %1054 = vmatpush1.bf16.msra.mxu0 %v770
    %1055 = vmatprep.subr.bf16.mxu0 0
    %1056 = vmatpush1.bf16.msra.mxu0 %v771
    %1057 = vmatprep.subr.bf16.mxu0 0
    %1058 = vmatpush1.bf16.msra.mxu0 %v772
    %1059 = vmatprep.subr.bf16.mxu0 0
    %1060 = vmatpush1.bf16.msra.mxu0 %v773
    %1061 = vmatprep.subr.bf16.mxu0 0
    %1062 = vmatpush1.bf16.msra.mxu0 %v774
    %1063 = vmatprep.subr.bf16.mxu0 0
    %1064 = vmatpush1.bf16.msra.mxu0 %v775
    %1065 = vmatprep.subr.bf16.mxu0 0
    %1066 = vmatpush1.bf16.msra.mxu0 %v776
    %1067 = vmatprep.mubr.bf16.mxu0 %v398
    %1068 = vmatmul.mubr.bf16.gmra.mrb[0].mxu0 %v397
    %v1069 = vpop.f32.mrb[0].mxu0
    %v1070 = vadd.f32 %v973, %v1069
    %v1071 = vpop.f32.mrb[0].mxu0
    %v1072 = vpop.f32.mrb[0].mxu0
    %v1073 = vadd.f32 %v976, %v1072
    %v1074 = vpop.f32.mrb[0].mxu0
    %1075 = vmatprep.mubr.bf16.mxu0 %v405
    %1076 = vmatmul.mubr.bf16.gmra.mrb[0].mxu0 %v404
    %v1077 = vpop.f32.mrb[0].mxu0
    %v1078 = vadd.f32 %v981, %v1077
    %v1079 = vpop.f32.mrb[0].mxu0
    %v1080 = vpop.f32.mrb[0].mxu0
    %v1081 = vadd.f32 %v984, %v1080
    %v1082 = vpop.f32.mrb[0].mxu0
    %1083 = vmatprep.mubr.bf16.mxu0 %v412
    %1084 = vmatmul.mubr.bf16.gmra.mrb[0].mxu0 %v411
    %v1085 = vpop.f32.mrb[0].mxu0
    %v1086 = vadd.f32 %v989, %v1085
    %v1087 = vpop.f32.mrb[0].mxu0
    %v1088 = vpop.f32.mrb[0].mxu0
    %v1089 = vadd.f32 %v992, %v1088
    %v1090 = vpop.f32.mrb[0].mxu0
    %1091 = vmatprep.mubr.bf16.mxu0 %v419
    %1092 = vmatmul.mubr.bf16.gmra.mrb[0].mxu0 %v418
    %v1093 = vpop.f32.mrb[0].mxu0
    %v1094 = vadd.f32 %v997, %v1093
    %v1095 = vpop.f32.mrb[0].mxu0
    %v1096 = vpop.f32.mrb[0].mxu0
    %v1097 = vadd.f32 %v1000, %v1096
    %v1098 = vpop.f32.mrb[0].mxu0
    %1099 = vmatprep.mubr.bf16.mxu0 %v426
    %1100 = vmatmul.mubr.bf16.gmra.mrb[0].mxu0 %v425
    %v1101 = vpop.f32.mrb[0].mxu0
    %v1102 = vadd.f32 %v1005, %v1101
    %v1103 = vpop.f32.mrb[0].mxu0
    %v1104 = vpop.f32.mrb[0].mxu0
    %v1105 = vadd.f32 %v1008, %v1104
    %v1106 = vpop.f32.mrb[0].mxu0
    %1107 = vmatprep.mubr.bf16.mxu0 %v433
    %1108 = vmatmul.mubr.bf16.gmra.mrb[0].mxu0 %v432
    %v1109 = vpop.f32.mrb[0].mxu0
    %v1110 = vadd.f32 %v1013, %v1109
    %v1111 = vpop.f32.mrb[0].mxu0
    %v1112 = vpop.f32.mrb[0].mxu0
    %v1113 = vadd.f32 %v1016, %v1112
    %v1114 = vpop.f32.mrb[0].mxu0
    %1115 = vmatprep.mubr.bf16.mxu0 %v440
    %1116 = vmatmul.mubr.bf16.gmra.mrb[0].mxu0 %v439
    %v1117 = vpop.f32.mrb[0].mxu0
    %v1118 = vadd.f32 %v1021, %v1117
    %v1119 = vpop.f32.mrb[0].mxu0
    %v1120 = vpop.f32.mrb[0].mxu0
    %v1121 = vadd.f32 %v1024, %v1120
    %v1122 = vpop.f32.mrb[0].mxu0
    %1123 = vmatprep.mubr.bf16.mxu0 %v447
    %1124 = vmatmul.mubr.bf16.gmra.mrb[0].mxu0 %v446
    %v1125 = vpop.f32.mrb[0].mxu0
    %v1126 = vadd.f32 %v1029, %v1125
    %v1127 = vpop.f32.mrb[0].mxu0
    %v1128 = vpop.f32.mrb[0].mxu0
    %v1129 = vadd.f32 %v1032, %v1128
    %v1130 = vpop.f32.mrb[0].mxu0
    %1131 = vdwg.mxu0
    %1132 = vmatprep.subr.bf16.mxu0 0
    %1133 = vmatpush1.bf16.msra.mxu0 %v777
    %1134 = vmatprep.subr.bf16.mxu0 0
    %1135 = vmatpush1.bf16.msra.mxu0 %v778
    %1136 = vmatprep.subr.bf16.mxu0 0
    %1137 = vmatpush1.bf16.msra.mxu0 %v779
    %1138 = vmatprep.subr.bf16.mxu0 0
    %1139 = vmatpush1.bf16.msra.mxu0 %v780
    %1140 = vmatprep.subr.bf16.mxu0 0
    %1141 = vmatpush1.bf16.msra.mxu0 %v781
    %1142 = vmatprep.subr.bf16.mxu0 0
    %1143 = vmatpush1.bf16.msra.mxu0 %v782
    %1144 = vmatprep.subr.bf16.mxu0 0
    %1145 = vmatpush1.bf16.msra.mxu0 %v783
    %1146 = vmatprep.subr.bf16.mxu0 0
    %1147 = vmatpush1.bf16.msra.mxu0 %v784
    %1148 = vmatprep.subr.bf16.mxu0 0
    %1149 = vmatpush1.bf16.msra.mxu0 0
    %1150 = vmatprep.subr.bf16.mxu0 0
    %1151 = vmatpush1.bf16.msra.mxu0 0
    %1152 = vmatprep.subr.bf16.mxu0 0
    %1153 = vmatpush1.bf16.msra.mxu0 0
    %1154 = vmatprep.subr.bf16.mxu0 0
    %1155 = vmatpush1.bf16.msra.mxu0 0
    %1156 = vmatprep.subr.bf16.mxu0 0
    %1157 = vmatpush1.bf16.msra.mxu0 0
    %1158 = vmatprep.subr.bf16.mxu0 0
    %1159 = vmatpush1.bf16.msra.mxu0 0
    %1160 = vmatprep.subr.bf16.mxu0 0
    %1161 = vmatpush1.bf16.msra.mxu0 0
    %1162 = vmatprep.subr.bf16.mxu0 0
    %1163 = vmatpush1.bf16.msra.mxu0 0
    %1164 = vmatprep.mubr.bf16.mxu0 0
    %1165 = vmatmul.mubr.bf16.gmra.mrb[0].mxu0 %v399
    %v1166 = vpop.f32.mrb[0].mxu0
    %v1167 = vadd.f32 %v1070, %v1166
    %v1168 = vpop.f32.mrb[0].mxu0
    %v1169 = vpop.f32.mrb[0].mxu0
    %v1170 = vadd.f32 %v1073, %v1169
    %v1171 = vpop.f32.mrb[0].mxu0
    %1172 = vmatprep.mubr.bf16.mxu0 0
    %1173 = vmatmul.mubr.bf16.gmra.mrb[0].mxu0 %v406
    %v1174 = vpop.f32.mrb[0].mxu0
    %v1175 = vadd.f32 %v1078, %v1174
    %v1176 = vpop.f32.mrb[0].mxu0
    %v1177 = vpop.f32.mrb[0].mxu0
    %v1178 = vadd.f32 %v1081, %v1177
    %v1179 = vpop.f32.mrb[0].mxu0
    %1180 = vmatprep.mubr.bf16.mxu0 0
    %1181 = vmatmul.mubr.bf16.gmra.mrb[0].mxu0 %v413
    %v1182 = vpop.f32.mrb[0].mxu0
    %v1183 = vadd.f32 %v1086, %v1182
    %v1184 = vpop.f32.mrb[0].mxu0
    %v1185 = vpop.f32.mrb[0].mxu0
    %v1186 = vadd.f32 %v1089, %v1185
    %v1187 = vpop.f32.mrb[0].mxu0
    %1188 = vmatprep.mubr.bf16.mxu0 0
    %1189 = vmatmul.mubr.bf16.gmra.mrb[0].mxu0 %v420
    %v1190 = vpop.f32.mrb[0].mxu0
    %v1191 = vadd.f32 %v1094, %v1190
    %v1192 = vpop.f32.mrb[0].mxu0
    %v1193 = vpop.f32.mrb[0].mxu0
    %v1194 = vadd.f32 %v1097, %v1193
    %v1195 = vpop.f32.mrb[0].mxu0
    %1196 = vmatprep.mubr.bf16.mxu0 0
    %1197 = vmatmul.mubr.bf16.gmra.mrb[0].mxu0 %v427
    %v1198 = vpop.f32.mrb[0].mxu0
    %v1199 = vadd.f32 %v1102, %v1198
    %v1200 = vpop.f32.mrb[0].mxu0
    %v1201 = vpop.f32.mrb[0].mxu0
    %v1202 = vadd.f32 %v1105, %v1201
    %v1203 = vpop.f32.mrb[0].mxu0
    %1204 = vmatprep.mubr.bf16.mxu0 0
    %1205 = vmatmul.mubr.bf16.gmra.mrb[0].mxu0 %v434
    %v1206 = vpop.f32.mrb[0].mxu0
    %v1207 = vadd.f32 %v1110, %v1206
    %v1208 = vpop.f32.mrb[0].mxu0
    %v1209 = vpop.f32.mrb[0].mxu0
    %v1210 = vadd.f32 %v1113, %v1209
    %v1211 = vpop.f32.mrb[0].mxu0
    %1212 = vmatprep.mubr.bf16.mxu0 0
    %1213 = vmatmul.mubr.bf16.gmra.mrb[0].mxu0 %v441
    %v1214 = vpop.f32.mrb[0].mxu0
    %v1215 = vadd.f32 %v1118, %v1214
    %v1216 = vpop.f32.mrb[0].mxu0
    %v1217 = vpop.f32.mrb[0].mxu0
    %v1218 = vadd.f32 %v1121, %v1217
    %v1219 = vpop.f32.mrb[0].mxu0
    %1220 = vmatprep.mubr.bf16.mxu0 0
    %1221 = vmatmul.mubr.bf16.gmra.mrb[0].mxu0 %v448
    %v1222 = vpop.f32.mrb[0].mxu0
    %v1223 = vadd.f32 %v1126, %v1222
    %v1224 = vpop.f32.mrb[0].mxu0
    %v1225 = vpop.f32.mrb[0].mxu0
    %v1226 = vadd.f32 %v1129, %v1225
    %v1227 = vpop.f32.mrb[0].mxu0
    %1228 = vdwg.mxu0
    %1229 = vst [vmem:[#allocation7] sm:$0xff] %v1167
    %1230 = vst [vmem:[#allocation7 + $0x8] sm:$0xff] %v1170
    %1231 = vst [vmem:[#allocation7 + $0x10] sm:$0xff] %v1175
    %1232 = vst [vmem:[#allocation7 + $0x18] sm:$0xff] %v1178
    %1233 = vst [vmem:[#allocation7 + $0x20] sm:$0xff] %v1183
    %1234 = vst [vmem:[#allocation7 + $0x28] sm:$0xff] %v1186
    %1235 = vst [vmem:[#allocation7 + $0x30] sm:$0xff] %v1191
    %1236 = vst [vmem:[#allocation7 + $0x38] sm:$0xff] %v1194
    %1237 = vst [vmem:[#allocation7 + $0x40] sm:$0xff] %v1199
    %1238 = vst [vmem:[#allocation7 + $0x48] sm:$0xff] %v1202
    %1239 = vst [vmem:[#allocation7 + $0x50] sm:$0xff] %v1207
    %1240 = vst [vmem:[#allocation7 + $0x58] sm:$0xff] %v1210
    %1241 = vst [vmem:[#allocation7 + $0x60] sm:$0xff] %v1215
    %1242 = vst [vmem:[#allocation7 + $0x68] sm:$0xff] %v1218
    %1243 = vst [vmem:[#allocation7 + $0x70] sm:$0xff] %v1223
    %1244 = vst [vmem:[#allocation7 + $0x78] sm:$0xff] %v1226
    // Predicated region
    $region18: #{tpu_custom_call.1} parent=1 // pred_check
      _
    $region19: #{tpu_custom_call.1} parent=1 // pred_check_branch
      %1246 = sbr.rel (0) target = $region21
    $region20: #{tpu_custom_call.1} parent=1 // pred_region
      %s1248 = ssub.s32 2048, 2048
      %1249 = vsyncadd [#allocation4], %s1248
      %s1250 = sshll.u32 [#allocation7], 4
      %s1251 = int_to_ptr.vmem [resolvable:$true] %s1250
      %1256 = dma.vmem_to_hbm [thread:$0]  %s1251, 2048, %s2, [#allocation4], 128, 128, 8
    $region21: #{tpu_custom_call.1} parent=1 // pred_fallthru
      _
    // Predicated region
    $region22: #{tpu_custom_call.1} parent=1 // pred_check
      _
    $region23: #{tpu_custom_call.1} parent=1 // pred_check_branch
      %1258 = sbr.rel (0) target = $region25
    $region24: #{tpu_custom_call.1} parent=1 // pred_region
      %1259 = dma.done [#allocation4], 2048
    $region25: #{tpu_custom_call.1} parent=1 // pred_fallthru
      _
    %1260 = vsyncpa [#allocation3], 1
    %1261 = vsyncpa [#allocation6], 1
    %1262 = vsyncpa [#allocation4], 1

</llo_original>
